<compile_context>
chip_gen: v7x
topology: tpu7x:2x2x1
jax: 0.10.0
libtpu: 0.0.40
codegen_flags: <defaults>
</compile_context>

<pallas_src>
from functools import partial

import jax
import jax.numpy as jnp
from jax.experimental import pallas as pl
from jax.experimental.pallas import tpu as pltpu

IN_DIM = 243
H1 = 128
H2 = 64
OUT_DIM = 1

H2_PAD = 128   # 64 padded to a lane multiple (pad cols are exact zeros)

DEFAULT_TILE_B = 2048  # sweep 2048-4096; 2048 keeps x double-buffer ~4 MB (f32)


def _round_up(n, m):
    return ((n + m - 1) // m) * m


def _uttt_mlp_kernel(x_ref, w1_ref, b1_ref, w2_ref, b2_ref, w3_ref, b3_ref, o_ref):
    """Fused 3-layer MLP forward for one batch tile.

    x_ref : (TB, 243)  f32  (cast to bf16 here; free VPU work hidden under DMA)
    w1_ref: (243, 128) bf16   b1_ref: (1, 128) f32
    w2_ref: (128, 128) bf16   b2_ref: (1, 128) f32   (cols 64..127 are zero pads)
    w3_ref: (1, 128)   f32    b3_ref: (1, 1)   f32   (cols 64..127 are zero pads)
    o_ref : (TB, 1)    f32
    """
    x = x_ref[...].astype(jnp.bfloat16)                                  # (TB, 243)

    # Layer 1: bf16 MXU matmul (true K=243, Mosaic masks), f32 accumulate.
    h1 = jnp.dot(x, w1_ref[...], preferred_element_type=jnp.float32)    # (TB, 128) f32
    h1 = jnp.maximum(h1 + b1_ref[...], 0.0)
    # dropout1: identity (eval mode)

    # Layer 2: bf16 MXU matmul, f32 accumulate.
    h2 = jnp.dot(h1.astype(jnp.bfloat16), w2_ref[...],
                 preferred_element_type=jnp.float32)                    # (TB, 128) f32
    h2 = jnp.maximum(h2 + b2_ref[...], 0.0)                             # pad cols stay 0
    # dropout2: identity (eval mode)

    # Layer 3 (N=1): VPU multiply + XLU lane reduction (keeps the MXU chain short).
    h3 = jnp.sum(h2 * w3_ref[...], axis=-1, keepdims=True)              # (TB, 1) f32
    o_ref[...] = jnp.tanh(h3 + b3_ref[...])


def prepare_params(params):
    """One-time prep: transpose to (in, out), zero-pad H2 to a lane multiple, cast
    MXU weights to bf16.  Do this at parameter-load time, not per forward call."""
    w1 = params["w1"].T.astype(jnp.bfloat16)                              # (243, 128)
    b1 = params["b1"].reshape(1, H1).astype(jnp.float32)
    w2 = jnp.zeros((H1, H2_PAD), jnp.float32).at[:, :H2].set(params["w2"].T)
    b2 = jnp.zeros((1, H2_PAD), jnp.float32).at[:, :H2].set(params["b2"])
    w3 = jnp.zeros((1, H2_PAD), jnp.float32).at[:, :H2].set(params["w3"])
    b3 = params["b3"].reshape(1, OUT_DIM).astype(jnp.float32)
    return {
        "w1": w1,
        "b1": b1,
        "w2": w2.astype(jnp.bfloat16),
        "b2": b2,
        "w3": w3,   # stays f32: used on the VPU, not the MXU
        "b3": b3,
    }


@partial(jax.jit, static_argnames=("tile_b",))
def uttt_evaluator_forward(x, prepped, tile_b=DEFAULT_TILE_B):
    """x: (B, 243) float32 (or bfloat16).  prepped: output of prepare_params().
    Returns (B, 1) float32."""
    B = x.shape[0]

    tb = min(tile_b, _round_up(max(B, 1), 8))        # 8 = f32 sublane granularity
    # v7x has 2 TensorCores: give the "parallel" batch axis >= 2 grid steps whenever
    # the batch is big enough to split, so both cores get work.
    if B >= 16 and pl.cdiv(B, tb) < 2:
        tb = max(8, _round_up(pl.cdiv(B, 2), 8))
    num_tiles = pl.cdiv(B, tb)

    flops = 2 * B * (IN_DIM * H1 + H1 * H2_PAD + H2_PAD)
    bytes_accessed = (
        B * IN_DIM * x.dtype.itemsize + B * OUT_DIM * 4
        + (IN_DIM * H1 + H1 * H2_PAD) * 2
        + (H1 + 2 * H2_PAD + 1) * 4
    )

    out = pl.pallas_call(
        _uttt_mlp_kernel,
        out_shape=jax.ShapeDtypeStruct((B, OUT_DIM), jnp.float32),
        grid=(num_tiles,),
        in_specs=[
            pl.BlockSpec((tb, IN_DIM), lambda i: (i, 0)),       # x: streamed per tile
            pl.BlockSpec((IN_DIM, H1), lambda i: (0, 0)),       # w1: resident
            pl.BlockSpec((1, H1), lambda i: (0, 0)),            # b1
            pl.BlockSpec((H1, H2_PAD), lambda i: (0, 0)),       # w2
            pl.BlockSpec((1, H2_PAD), lambda i: (0, 0)),        # b2
            pl.BlockSpec((1, H2_PAD), lambda i: (0, 0)),        # w3 (row, f32)
            pl.BlockSpec((1, OUT_DIM), lambda i: (0, 0)),       # b3
        ],
        out_specs=pl.BlockSpec((tb, OUT_DIM), lambda i: (i, 0)),
        compiler_params=pltpu.CompilerParams(
            dimension_semantics=("parallel",),
        ),
        cost_estimate=pl.CostEstimate(
            flops=flops,
            transcendentals=B,
            bytes_accessed=bytes_accessed,
        ),
    )(x, prepped["w1"], prepped["b1"], prepped["w2"], prepped["b2"],
      prepped["w3"], prepped["b3"])

    return out


def init_params(key):
    """Deterministic synthetic parameters with PyTorch nn.Linear shapes."""
    k1, k2, k3, k4, k5, k6 = jax.random.split(key, 6)

    def uniform(k, shape, fan_in):
        bound = 1.0 / jnp.sqrt(fan_in)
        return jax.random.uniform(k, shape, jnp.float32, -bound, bound)

    return {
        "w1": uniform(k1, (H1, IN_DIM), IN_DIM),    # (128, 243)
        "b1": uniform(k2, (H1,), IN_DIM),
        "w2": uniform(k3, (H2, H1), H1),            # (64, 128)
        "b2": uniform(k4, (H2,), H1),
        "w3": uniform(k5, (OUT_DIM, H2), H2),       # (1, 64)
        "b3": uniform(k6, (OUT_DIM,), H2),
    }


def reference_forward(x, params):
    """Plain-JAX f32 reference matching the PyTorch forward (eval mode)."""
    h1 = jnp.maximum(x @ params["w1"].T + params["b1"], 0.0)
    h2 = jnp.maximum(h1 @ params["w2"].T + params["b2"], 0.0)
    return jnp.tanh(h2 @ params["w3"].T + params["b3"])


if __name__ == "__main__":
    key = jax.random.PRNGKey(0)
    pkey, xkey = jax.random.split(key)

    params = init_params(pkey)
    prepped = prepare_params(params)

    batch = 8
    x = jax.random.normal(xkey, (batch, IN_DIM), jnp.float32)

    out = uttt_evaluator_forward(x, prepped)
    out = jax.block_until_ready(out)

    ref = reference_forward(x, params)
    assert out.shape == (batch, OUT_DIM), out.shape
    # bf16 matmuls with f32 accumulation -> relaxed tolerance vs the f32 reference.
    assert jnp.allclose(out, ref, atol=2e-2, rtol=2e-2), float(jnp.max(jnp.abs(out - ref)))

    print("KERNEL_OK")
</pallas_src>

<mosaic_0001>
module attributes {stable_mosaic.version = 11 : i64} {
  func.func @_uttt_mlp_kernel(%arg0: i32, %arg1: memref<8x243xf32, #tpu.memory_space<vmem>>, %arg2: memref<243x128xbf16, #tpu.memory_space<vmem>>, %arg3: memref<1x128xf32, #tpu.memory_space<vmem>>, %arg4: memref<128x128xbf16, #tpu.memory_space<vmem>>, %arg5: memref<1x128xf32, #tpu.memory_space<vmem>>, %arg6: memref<1x128xf32, #tpu.memory_space<vmem>>, %arg7: memref<1x1xf32, #tpu.memory_space<vmem>>, %arg8: memref<8x1xf32, #tpu.memory_space<vmem>>) attributes {dimension_semantics = [#tpu.dimension_semantics<parallel>], iteration_bounds = array<i64: 1>, scalar_prefetch = 0 : i64, scratch_operands = 0 : i64, tpu.core_type = #tpu.core_type<tc>, window_params = [{transform_indices = @transform_0, window_bounds = array<i64: 8, 243>}, {pipeline_mode = #tpu.pipeline_mode<synchronous>, transform_indices = @transform_1, window_bounds = array<i64: 243, 128>}, {pipeline_mode = #tpu.pipeline_mode<synchronous>, transform_indices = @transform_2, window_bounds = array<i64: 1, 128>}, {pipeline_mode = #tpu.pipeline_mode<synchronous>, transform_indices = @transform_3, window_bounds = array<i64: 128, 128>}, {pipeline_mode = #tpu.pipeline_mode<synchronous>, transform_indices = @transform_4, window_bounds = array<i64: 1, 128>}, {pipeline_mode = #tpu.pipeline_mode<synchronous>, transform_indices = @transform_5, window_bounds = array<i64: 1, 128>}, {pipeline_mode = #tpu.pipeline_mode<synchronous>, transform_indices = @transform_6, window_bounds = array<i64: 1, 1>}, {transform_indices = @transform_7, window_bounds = array<i64: 8, 1>}]} {
    %c0 = arith.constant 0 : index
    %c0_0 = arith.constant 0 : index
    %0 = vector.load %arg1[%c0, %c0_0] : memref<8x243xf32, #tpu.memory_space<vmem>>, vector<8x243xf32>
    %1 = arith.truncf %0 : vector<8x243xf32> to vector<8x243xbf16>
    %c0_1 = arith.constant 0 : index
    %c0_2 = arith.constant 0 : index
    %2 = vector.load %arg2[%c0_1, %c0_2] : memref<243x128xbf16, #tpu.memory_space<vmem>>, vector<243x128xbf16>
    %cst = arith.constant dense<0.000000e+00> : vector<8x128xf32>
    %3 = tpu.matmul %1, %2, %cst {dimension_numbers = #tpu.dot_dimension_numbers<[1], [0], [0], [1], [0, 0, 1, 1], [], []>} : vector<8x243xbf16>, vector<243x128xbf16>, vector<8x128xf32> -> vector<8x128xf32>
    %c0_3 = arith.constant 0 : index
    %c0_4 = arith.constant 0 : index
    %4 = vector.load %arg3[%c0_3, %c0_4] : memref<1x128xf32, #tpu.memory_space<vmem>>, vector<1x128xf32>
    %5 = vector.broadcast %4 : vector<1x128xf32> to vector<8x128xf32>
    %6 = arith.addf %3, %5 : vector<8x128xf32>
    %cst_5 = arith.constant 0.000000e+00 : f32
    %7 = vector.broadcast %cst_5 : f32 to vector<8x128xf32>
    %8 = arith.maximumf %6, %7 : vector<8x128xf32>
    %9 = arith.truncf %8 : vector<8x128xf32> to vector<8x128xbf16>
    %c0_6 = arith.constant 0 : index
    %c0_7 = arith.constant 0 : index
    %10 = vector.load %arg4[%c0_6, %c0_7] : memref<128x128xbf16, #tpu.memory_space<vmem>>, vector<128x128xbf16>
    %cst_8 = arith.constant dense<0.000000e+00> : vector<8x128xf32>
    %11 = tpu.matmul %9, %10, %cst_8 {dimension_numbers = #tpu.dot_dimension_numbers<[1], [0], [0], [1], [0, 0, 1, 1], [], []>} : vector<8x128xbf16>, vector<128x128xbf16>, vector<8x128xf32> -> vector<8x128xf32>
    %c0_9 = arith.constant 0 : index
    %c0_10 = arith.constant 0 : index
    %12 = vector.load %arg5[%c0_9, %c0_10] : memref<1x128xf32, #tpu.memory_space<vmem>>, vector<1x128xf32>
    %13 = vector.broadcast %12 : vector<1x128xf32> to vector<8x128xf32>
    %14 = arith.addf %11, %13 : vector<8x128xf32>
    %cst_11 = arith.constant 0.000000e+00 : f32
    %15 = vector.broadcast %cst_11 : f32 to vector<8x128xf32>
    %16 = arith.maximumf %14, %15 : vector<8x128xf32>
    %c0_12 = arith.constant 0 : index
    %c0_13 = arith.constant 0 : index
    %17 = vector.load %arg6[%c0_12, %c0_13] : memref<1x128xf32, #tpu.memory_space<vmem>>, vector<1x128xf32>
    %18 = vector.broadcast %17 : vector<1x128xf32> to vector<8x128xf32>
    %19 = arith.mulf %16, %18 : vector<8x128xf32>
    %cst_14 = arith.constant dense<0.000000e+00> : vector<8xf32>
    %20 = vector.multi_reduction <add>, %19, %cst_14 [1] : vector<8x128xf32> to vector<8xf32>
    %21 = vector.shape_cast %20 : vector<8xf32> to vector<8x1xf32>
    %c0_15 = arith.constant 0 : index
    %c0_16 = arith.constant 0 : index
    %22 = vector.load %arg7[%c0_15, %c0_16] : memref<1x1xf32, #tpu.memory_space<vmem>>, vector<1x1xf32>
    %23 = vector.broadcast %22 : vector<1x1xf32> to vector<8x1xf32>
    %24 = arith.addf %21, %23 : vector<8x1xf32>
    %25 = math.tanh %24 : vector<8x1xf32>
    %c0_17 = arith.constant 0 : index
    %c0_18 = arith.constant 0 : index
    %26 = vector.load %arg8[%c0_17, %c0_18] : memref<8x1xf32, #tpu.memory_space<vmem>>, vector<8x1xf32>
    tpu.vector_store %arg8[%c0_17, %c0_18], %25 {strides = array<i32>} : memref<8x1xf32, #tpu.memory_space<vmem>>, vector<8x1xf32>,
    return
  }
  func.func @transform_0(%arg0: i32) -> (i32, i32) {
    %c0_i32 = arith.constant 0 : i32
    %c0_i32_0 = arith.constant 0 : i32
    return %arg0, %c0_i32 : i32, i32
  }
  func.func @transform_1(%arg0: i32) -> (i32, i32) {
    %c0_i32 = arith.constant 0 : i32
    %c0_i32_0 = arith.constant 0 : i32
    %c0_i32_1 = arith.constant 0 : i32
    return %c0_i32, %c0_i32_0 : i32, i32
  }
  func.func @transform_2(%arg0: i32) -> (i32, i32) {
    %c0_i32 = arith.constant 0 : i32
    %c0_i32_0 = arith.constant 0 : i32
    %c0_i32_1 = arith.constant 0 : i32
    return %c0_i32, %c0_i32_0 : i32, i32
  }
  func.func @transform_3(%arg0: i32) -> (i32, i32) {
    %c0_i32 = arith.constant 0 : i32
    %c0_i32_0 = arith.constant 0 : i32
    %c0_i32_1 = arith.constant 0 : i32
    return %c0_i32, %c0_i32_0 : i32, i32
  }
  func.func @transform_4(%arg0: i32) -> (i32, i32) {
    %c0_i32 = arith.constant 0 : i32
    %c0_i32_0 = arith.constant 0 : i32
    %c0_i32_1 = arith.constant 0 : i32
    return %c0_i32, %c0_i32_0 : i32, i32
  }
  func.func @transform_5(%arg0: i32) -> (i32, i32) {
    %c0_i32 = arith.constant 0 : i32
    %c0_i32_0 = arith.constant 0 : i32
    %c0_i32_1 = arith.constant 0 : i32
    return %c0_i32, %c0_i32_0 : i32, i32
  }
  func.func @transform_6(%arg0: i32) -> (i32, i32) {
    %c0_i32 = arith.constant 0 : i32
    %c0_i32_0 = arith.constant 0 : i32
    %c0_i32_1 = arith.constant 0 : i32
    return %c0_i32, %c0_i32_0 : i32, i32
  }
  func.func @transform_7(%arg0: i32) -> (i32, i32) {
    %c0_i32 = arith.constant 0 : i32
    %c0_i32_0 = arith.constant 0 : i32
    return %arg0, %c0_i32 : i32, i32
  }
}

</mosaic_0001>

<llo_original>
// kernel: uttt_evaluator_forward.1
$region0: #{uttt_evaluator_forward.1}
  #allocation0 [shape = 'u32[]', space=smem, size = 0x4, offset = 0x4, fixed_abs, tag = 'smem constant byte address 0x4 - core index']
  #allocation1 [shape = 'u32[144,128]{1,0:T(1,128)}', space=vmem, size = 0x12000, scoped, tag = 'internal scratch']
  #allocation2 [shape = 'f32[1,1]{1,0:T(1,128)S(1)}', space=vmem, size = 0x200, scoped, tag = 'scoped memory for uttt_evaluator_forward.1']
  %s0 = inlined_call_operand.hbm [shape: f32[8,243], index: 0, kind: input, shape index: {}]
  %s1 = inlined_call_operand.hbm [shape: bf16[243,128], index: 1, kind: input, shape index: {}]
  %s2 = inlined_call_operand.vmem [shape: f32[1,128], index: 2, kind: input, shape index: {}]
  %s3 = inlined_call_operand.hbm [shape: bf16[128,128], index: 3, kind: input, shape index: {}]
  %s4 = inlined_call_operand.vmem [shape: f32[1,128], index: 4, kind: input, shape index: {}]
  %s5 = inlined_call_operand.vmem [shape: f32[1,128], index: 5, kind: input, shape index: {}]
  %s6 = inlined_call_operand.<no memory space> [shape: f32[1,1], index: 6, kind: input, shape index: {}]
  %s7 = inlined_call_operand.vmem [shape: f32[8,1], index: 7, kind: output, shape index: {}]
  %s8 = sld [smem:[#allocation0]]
  $region50: #{uttt_evaluator_forward.1} parent=0
    _
  %s10 = ssub.s32 1, %s8
  %s11 = scalar_select 0, %s10, %s8
  %v12 = vstv %s6
  %13 = vst [vmem:[#allocation2] sm:$0x1] %v12
  $region1: #{uttt_evaluator_forward.1} parent=0
    #allocation3 [shape = 'u8[8192]{0}', space=vmem, size = 0x2000, scoped, tag = 'input window, operand 0, single buffered']
    #allocation4 [shape = 's32[1]{0}', space=sflag, size = 0x4, scoped, tag = 'scoped memory for uttt_evaluator_forward.1']
    #allocation5 [shape = 'u8[63488]{0}', space=vmem, size = 0xf800, scoped, tag = 'input window, operand 1, single buffered']
    #allocation6 [shape = 's32[1]{0}', space=sflag, size = 0x4, scoped, tag = 'scoped memory for uttt_evaluator_forward.1']
    #allocation7 [shape = 'u8[32768]{0}', space=vmem, size = 0x8000, scoped, tag = 'input window, operand 3, single buffered']
    %14 = vsyncpa [#allocation4], 0
    %15 = vsyncpa [#allocation6], 0
    // Predicated region
    $region2: #{uttt_evaluator_forward.1} parent=1 // pred_check
      _
    $region3: #{uttt_evaluator_forward.1} parent=1 // pred_check_branch
      %17 = sbr.rel (0) target = $region5
    $region4: #{uttt_evaluator_forward.1} parent=1 // pred_region
      %s19 = ssub.s32 256, 256
      %20 = vsyncadd [#allocation4], %s19
      %s22 = sshll.u32 [#allocation3], 4
      %s23 = int_to_ptr.vmem [resolvable:$true] %s22
      %25 = dma.hbm_to_vmem [thread:$0]  %s0, 256, %s23, [#allocation4]
    $region5: #{uttt_evaluator_forward.1} parent=1 // pred_fallthru
      _
    // Predicated region
    $region6: #{uttt_evaluator_forward.1} parent=1 // pred_check
      _
    $region7: #{uttt_evaluator_forward.1} parent=1 // pred_check_branch
      %27 = sbr.rel (0) target = $region9
    $region8: #{uttt_evaluator_forward.1} parent=1 // pred_region
      %s29 = ssub.s32 1984, 1984
      %30 = vsyncadd [#allocation6], %s29
      %s31 = sshll.u32 [#allocation5], 4
      %s32 = int_to_ptr.vmem [resolvable:$true] %s31
      %37 = dma.hbm_to_vmem [thread:$0]  %s1, 1984, %s32, [#allocation6], 64, 64, 4
    $region9: #{uttt_evaluator_forward.1} parent=1 // pred_fallthru
      _
    // Predicated region
    $region10: #{uttt_evaluator_forward.1} parent=1 // pred_check
      _
    $region11: #{uttt_evaluator_forward.1} parent=1 // pred_check_branch
      %39 = sbr.rel (0) target = $region13
    $region12: #{uttt_evaluator_forward.1} parent=1 // pred_region
      _
    $region13: #{uttt_evaluator_forward.1} parent=1 // pred_fallthru
      _
    // Predicated region
    $region14: #{uttt_evaluator_forward.1} parent=1 // pred_check
      _
    $region15: #{uttt_evaluator_forward.1} parent=1 // pred_check_branch
      %41 = sbr.rel (0) target = $region17
    $region16: #{uttt_evaluator_forward.1} parent=1 // pred_region
      %s43 = ssub.s32 1024, 1024
      %44 = vsyncadd [#allocation6], %s43
      %s45 = sshll.u32 [#allocation7], 4
      %s46 = int_to_ptr.vmem [resolvable:$true] %s45
      %51 = dma.hbm_to_vmem [thread:$0]  %s3, 1024, %s46, [#allocation6], 64, 64, 4
    $region17: #{uttt_evaluator_forward.1} parent=1 // pred_fallthru
      _
    // Predicated region
    $region18: #{uttt_evaluator_forward.1} parent=1 // pred_check
      _
    $region19: #{uttt_evaluator_forward.1} parent=1 // pred_check_branch
      %53 = sbr.rel (0) target = $region21
    $region20: #{uttt_evaluator_forward.1} parent=1 // pred_region
      _
    $region21: #{uttt_evaluator_forward.1} parent=1 // pred_fallthru
      _
    // Predicated region
    $region22: #{uttt_evaluator_forward.1} parent=1 // pred_check
      _
    $region23: #{uttt_evaluator_forward.1} parent=1 // pred_check_branch
      %55 = sbr.rel (0) target = $region25
    $region24: #{uttt_evaluator_forward.1} parent=1 // pred_region
      _
    $region25: #{uttt_evaluator_forward.1} parent=1 // pred_fallthru
      _
    // Predicated region
    $region26: #{uttt_evaluator_forward.1} parent=1 // pred_check
      _
    $region27: #{uttt_evaluator_forward.1} parent=1 // pred_check_branch
      %57 = sbr.rel (0) target = $region29
    $region28: #{uttt_evaluator_forward.1} parent=1 // pred_region
      _
    $region29: #{uttt_evaluator_forward.1} parent=1 // pred_fallthru
      _
    // Predicated region
    $region30: #{uttt_evaluator_forward.1} parent=1 // pred_check
      _
    $region31: #{uttt_evaluator_forward.1} parent=1 // pred_check_branch
      %59 = sbr.rel (0) target = $region33
    $region32: #{uttt_evaluator_forward.1} parent=1 // pred_region
      %60 = dma.done [#allocation4], 256
    $region33: #{uttt_evaluator_forward.1} parent=1 // pred_fallthru
      _
    // Predicated region
    $region34: #{uttt_evaluator_forward.1} parent=1 // pred_check
      _
    $region35: #{uttt_evaluator_forward.1} parent=1 // pred_check_branch
      %62 = sbr.rel (0) target = $region37
    $region36: #{uttt_evaluator_forward.1} parent=1 // pred_region
      %63 = dma.done [#allocation6], 1984
    $region37: #{uttt_evaluator_forward.1} parent=1 // pred_fallthru
      _
    // Predicated region
    $region38: #{uttt_evaluator_forward.1} parent=1 // pred_check
      _
    $region39: #{uttt_evaluator_forward.1} parent=1 // pred_check_branch
      %65 = sbr.rel (0) target = $region41
    $region40: #{uttt_evaluator_forward.1} parent=1 // pred_region
      %66 = dma.done [#allocation6], 1024
    $region41: #{uttt_evaluator_forward.1} parent=1 // pred_fallthru
      _
    %v68 = vld [vmem:[#allocation3] sm:$0xff]
    %v69 = vld [vmem:[#allocation3 + $0x8] sm:$0xff]
    %v70 = vpack.c.bf16 %v68, %v68
    %v71 = vpack.c.bf16 %v69, %v69
    %v72 = vld [vmem:[#allocation5] sm:$0xf]
    %v73 = vld [vmem:[#allocation5 + $0x4] sm:$0xf]
    %v74 = vld [vmem:[#allocation5 + $0x8] sm:$0xf]
    %v75 = vld [vmem:[#allocation5 + $0xc] sm:$0xf]
    %v76 = vld [vmem:[#allocation5 + $0x10] sm:$0xf]
    %v77 = vld [vmem:[#allocation5 + $0x14] sm:$0xf]
    %v78 = vld [vmem:[#allocation5 + $0x18] sm:$0xf]
    %v79 = vld [vmem:[#allocation5 + $0x1c] sm:$0xf]
    %v80 = vld [vmem:[#allocation5 + $0x20] sm:$0xf]
    %v81 = vld [vmem:[#allocation5 + $0x24] sm:$0xf]
    %v82 = vld [vmem:[#allocation5 + $0x28] sm:$0xf]
    %v83 = vld [vmem:[#allocation5 + $0x2c] sm:$0xf]
    %v84 = vld [vmem:[#allocation5 + $0x30] sm:$0xf]
    %v85 = vld [vmem:[#allocation5 + $0x34] sm:$0xf]
    %v86 = vld [vmem:[#allocation5 + $0x38] sm:$0xf]
    %v87 = vld [vmem:[#allocation5 + $0x3c] sm:$0xf]
    %v88 = vld [vmem:[#allocation5 + $0x40] sm:$0xf]
    %v89 = vld [vmem:[#allocation5 + $0x44] sm:$0xf]
    %v90 = vld [vmem:[#allocation5 + $0x48] sm:$0xf]
    %v91 = vld [vmem:[#allocation5 + $0x4c] sm:$0xf]
    %v92 = vld [vmem:[#allocation5 + $0x50] sm:$0xf]
    %v93 = vld [vmem:[#allocation5 + $0x54] sm:$0xf]
    %v94 = vld [vmem:[#allocation5 + $0x58] sm:$0xf]
    %v95 = vld [vmem:[#allocation5 + $0x5c] sm:$0xf]
    %v96 = vld [vmem:[#allocation5 + $0x60] sm:$0xf]
    %v97 = vld [vmem:[#allocation5 + $0x64] sm:$0xf]
    %v98 = vld [vmem:[#allocation5 + $0x68] sm:$0xf]
    %v99 = vld [vmem:[#allocation5 + $0x6c] sm:$0xf]
    %v100 = vld [vmem:[#allocation5 + $0x70] sm:$0xf]
    %v101 = vld [vmem:[#allocation5 + $0x74] sm:$0xf]
    %v102 = vld [vmem:[#allocation5 + $0x78] sm:$0x3]
    %v103 = vld [vmem:[%s2] sm:$0x1]
    %v105 = vlaneseq
    %v106 = vshrl.u32 %v105, 7
    %v107 = vsub.s32 0, %v106
    %v108 = vrot.slane %v103, %v107
    %v141 = vunpack.c.l.b16 %v72
    %v142 = vunpack.c.l.b16 %v73
    %v143 = vunpack.c.l.b16 %v74
    %v144 = vunpack.c.l.b16 %v75
    %v145 = vunpack.c.l.b16 %v76
    %v146 = vunpack.c.l.b16 %v77
    %v147 = vunpack.c.l.b16 %v78
    %v148 = vunpack.c.l.b16 %v79
    %v149 = vunpack.c.l.b16 %v80
    %v150 = vunpack.c.l.b16 %v81
    %v151 = vunpack.c.l.b16 %v82
    %v152 = vunpack.c.l.b16 %v83
    %v153 = vunpack.c.l.b16 %v84
    %v154 = vunpack.c.l.b16 %v85
    %v155 = vunpack.c.l.b16 %v86
    %v156 = vunpack.c.l.b16 %v87
    %v157 = vunpack.c.l.b16 %v88
    %v158 = vunpack.c.l.b16 %v89
    %v159 = vunpack.c.l.b16 %v90
    %v160 = vunpack.c.l.b16 %v91
    %v161 = vunpack.c.l.b16 %v92
    %v162 = vunpack.c.l.b16 %v93
    %v163 = vunpack.c.l.b16 %v94
    %v164 = vunpack.c.l.b16 %v95
    %v165 = vunpack.c.l.b16 %v96
    %v166 = vunpack.c.l.b16 %v97
    %v167 = vunpack.c.l.b16 %v98
    %v168 = vunpack.c.l.b16 %v99
    %v169 = vunpack.c.l.b16 %v100
    %v170 = vunpack.c.l.b16 %v101
    %v171 = vunpack.c.l.b16 %v102
    %v172 = vpack.c.b16 %v142, %v141
    %v173 = vpack.c.b16 %v144, %v143
    %v174 = vpack.c.b16 %v146, %v145
    %v175 = vpack.c.b16 %v148, %v147
    %v176 = vpack.c.b16 %v150, %v149
    %v177 = vpack.c.b16 %v152, %v151
    %v178 = vpack.c.b16 %v154, %v153
    %v179 = vpack.c.b16 %v156, %v155
    %v180 = vpack.c.b16 %v158, %v157
    %v181 = vpack.c.b16 %v160, %v159
    %v182 = vpack.c.b16 %v162, %v161
    %v183 = vpack.c.b16 %v164, %v163
    %v184 = vpack.c.b16 %v166, %v165
    %v185 = vpack.c.b16 %v168, %v167
    %v186 = vpack.c.b16 %v170, %v169
    %v187 = vpack.c.b16 %v171, %v171
    %vm203 = vcmask 941056
    %v205 = vsel %vm203, %v71, 0
    %vm207 = vcmask 1040384
    %vm208 = vcmask 1041408
    %v209 = vsel %vm207, 4294967295, 65535
    %v210 = vsel %vm208, %v209, 0
    %v212 = vand.u32 %v187, %v210
    %214 = vmatprep.subr.bf16.mxu0 0
    %215 = vmatpush1.bf16.msra.mxu0 %v172
    %216 = vmatprep.subr.bf16.mxu0 0
    %217 = vmatpush1.bf16.msra.mxu0 %v173
    %218 = vmatprep.subr.bf16.mxu0 0
    %219 = vmatpush1.bf16.msra.mxu0 %v174
    %220 = vmatprep.subr.bf16.mxu0 0
    %221 = vmatpush1.bf16.msra.mxu0 %v175
    %222 = vmatprep.subr.bf16.mxu0 0
    %223 = vmatpush1.bf16.msra.mxu0 %v176
    %224 = vmatprep.subr.bf16.mxu0 0
    %225 = vmatpush1.bf16.msra.mxu0 %v177
    %226 = vmatprep.subr.bf16.mxu0 0
    %227 = vmatpush1.bf16.msra.mxu0 %v178
    %228 = vmatprep.subr.bf16.mxu0 0
    %229 = vmatpush1.bf16.msra.mxu0 %v179
    %230 = vmatprep.subr.bf16.mxu0 0
    %231 = vmatpush1.bf16.msra.mxu0 %v180
    %232 = vmatprep.subr.bf16.mxu0 0
    %233 = vmatpush1.bf16.msra.mxu0 %v181
    %234 = vmatprep.subr.bf16.mxu0 0
    %235 = vmatpush1.bf16.msra.mxu0 %v182
    %236 = vmatprep.subr.bf16.mxu0 0
    %237 = vmatpush1.bf16.msra.mxu0 %v183
    %238 = vmatprep.subr.bf16.mxu0 0
    %239 = vmatpush1.bf16.msra.mxu0 %v184
    %240 = vmatprep.subr.bf16.mxu0 0
    %241 = vmatpush1.bf16.msra.mxu0 %v185
    %242 = vmatprep.subr.bf16.mxu0 0
    %243 = vmatpush1.bf16.msra.mxu0 %v186
    %244 = vmatprep.subr.bf16.mxu0 0
    %245 = vmatpush1.bf16.msra.mxu0 %v212
    %246 = vmatprep.mubr.bf16.mxu0 %v205
    %247 = vmatmul.mubr.bf16.gmra.mrb[0].mxu0 %v70
    %v248 = vpop.f32.mrb[0].mxu0
    %v249 = vadd.f32 %v108, %v248
    %v250 = vpop.f32.mrb[0].mxu0
    %v251 = vpop.f32.mrb[0].mxu0
    %v252 = vpop.f32.mrb[0].mxu0
    %253 = vdwg.mxu0
    %v254 = vmax.f32 %v249, 0.0
    %v255 = vpack.c.bf16 %v254, %v254
    %v256 = vld [vmem:[#allocation7] sm:$0xf]
    %v257 = vld [vmem:[#allocation7 + $0x4] sm:$0xf]
    %v258 = vld [vmem:[#allocation7 + $0x8] sm:$0xf]
    %v259 = vld [vmem:[#allocation7 + $0xc] sm:$0xf]
    %v260 = vld [vmem:[#allocation7 + $0x10] sm:$0xf]
    %v261 = vld [vmem:[#allocation7 + $0x14] sm:$0xf]
    %v262 = vld [vmem:[#allocation7 + $0x18] sm:$0xf]
    %v263 = vld [vmem:[#allocation7 + $0x1c] sm:$0xf]
    %v264 = vld [vmem:[#allocation7 + $0x20] sm:$0xf]
    %v265 = vld [vmem:[#allocation7 + $0x24] sm:$0xf]
    %v266 = vld [vmem:[#allocation7 + $0x28] sm:$0xf]
    %v267 = vld [vmem:[#allocation7 + $0x2c] sm:$0xf]
    %v268 = vld [vmem:[#allocation7 + $0x30] sm:$0xf]
    %v269 = vld [vmem:[#allocation7 + $0x34] sm:$0xf]
    %v270 = vld [vmem:[#allocation7 + $0x38] sm:$0xf]
    %v271 = vld [vmem:[#allocation7 + $0x3c] sm:$0xf]
    %v272 = vld [vmem:[%s4] sm:$0x1]
    %v274 = vlaneseq
    %v275 = vshrl.u32 %v274, 7
    %v276 = vsub.s32 0, %v275
    %v277 = vrot.slane %v272, %v276
    %v295 = vunpack.c.l.b16 %v256
    %v296 = vunpack.c.l.b16 %v257
    %v297 = vunpack.c.l.b16 %v258
    %v298 = vunpack.c.l.b16 %v259
    %v299 = vunpack.c.l.b16 %v260
    %v300 = vunpack.c.l.b16 %v261
    %v301 = vunpack.c.l.b16 %v262
    %v302 = vunpack.c.l.b16 %v263
    %v303 = vunpack.c.l.b16 %v264
    %v304 = vunpack.c.l.b16 %v265
    %v305 = vunpack.c.l.b16 %v266
    %v306 = vunpack.c.l.b16 %v267
    %v307 = vunpack.c.l.b16 %v268
    %v308 = vunpack.c.l.b16 %v269
    %v309 = vunpack.c.l.b16 %v270
    %v310 = vunpack.c.l.b16 %v271
    %v311 = vpack.c.b16 %v296, %v295
    %v312 = vpack.c.b16 %v298, %v297
    %v313 = vpack.c.b16 %v300, %v299
    %v314 = vpack.c.b16 %v302, %v301
    %v315 = vpack.c.b16 %v304, %v303
    %v316 = vpack.c.b16 %v306, %v305
    %v317 = vpack.c.b16 %v308, %v307
    %v318 = vpack.c.b16 %v310, %v309
    %327 = vmatprep.subr.bf16.mxu0 0
    %328 = vmatpush1.bf16.msra.mxu0 %v311
    %329 = vmatprep.subr.bf16.mxu0 0
    %330 = vmatpush1.bf16.msra.mxu0 %v312
    %331 = vmatprep.subr.bf16.mxu0 0
    %332 = vmatpush1.bf16.msra.mxu0 %v313
    %333 = vmatprep.subr.bf16.mxu0 0
    %334 = vmatpush1.bf16.msra.mxu0 %v314
    %335 = vmatprep.subr.bf16.mxu0 0
    %336 = vmatpush1.bf16.msra.mxu0 %v315
    %337 = vmatprep.subr.bf16.mxu0 0
    %338 = vmatpush1.bf16.msra.mxu0 %v316
    %339 = vmatprep.subr.bf16.mxu0 0
    %340 = vmatpush1.bf16.msra.mxu0 %v317
    %341 = vmatprep.subr.bf16.mxu0 0
    %342 = vmatpush1.bf16.msra.mxu0 %v318
    %343 = vmatprep.subr.bf16.mxu0 0
    %344 = vmatpush1.bf16.msra.mxu0 0
    %345 = vmatprep.subr.bf16.mxu0 0
    %346 = vmatpush1.bf16.msra.mxu0 0
    %347 = vmatprep.subr.bf16.mxu0 0
    %348 = vmatpush1.bf16.msra.mxu0 0
    %349 = vmatprep.subr.bf16.mxu0 0
    %350 = vmatpush1.bf16.msra.mxu0 0
    %351 = vmatprep.subr.bf16.mxu0 0
    %352 = vmatpush1.bf16.msra.mxu0 0
    %353 = vmatprep.subr.bf16.mxu0 0
    %354 = vmatpush1.bf16.msra.mxu0 0
    %355 = vmatprep.subr.bf16.mxu0 0
    %356 = vmatpush1.bf16.msra.mxu0 0
    %357 = vmatprep.subr.bf16.mxu0 0
    %358 = vmatpush1.bf16.msra.mxu0 0
    %359 = vmatprep.mubr.bf16.mxu0 0
    %360 = vmatmul.mubr.bf16.gmra.mrb[0].mxu0 %v255
    %v361 = vpop.f32.mrb[0].mxu0
    %v362 = vadd.f32 %v277, %v361
    %v363 = vpop.f32.mrb[0].mxu0
    %v364 = vpop.f32.mrb[0].mxu0
    %v365 = vpop.f32.mrb[0].mxu0
    %366 = vdwg.mxu0
    %v367 = vmax.f32 %v362, 0.0
    %v368 = vld [vmem:[%s5] sm:$0x1]
    %v370 = vlaneseq
    %v371 = vshrl.u32 %v370, 7
    %v372 = vsub.s32 0, %v371
    %v373 = vrot.slane %v368, %v372
    %v375 = vmul.f32 %v367, %v373
    %376 = vadd.xlane.f32.xlu0 %v375
    %v377 = vpop.xlane.xlu0 %376
    %v378 = vld [vmem:[#allocation2] sm:$0x1]
    %v380 = vlaneseq
    %v381 = vshrl.u32 %v380, 7
    %v382 = vsub.s32 0, %v381
    %v383 = vrot.slane %v378, %v382
    %v385 = vadd.f32 %v377, %v383
    %v386 = vtanh.pop %v385
    %vm387 = vcmask 7168
    %388 = vst.msk [vmem:[%s7] sm:$0xff] %vm387, %v386
    // Predicated region
    $region42: #{uttt_evaluator_forward.1} parent=1 // pred_check
      _
    $region43: #{uttt_evaluator_forward.1} parent=1 // pred_check_branch
      %390 = sbr.rel (0) target = $region45
    $region44: #{uttt_evaluator_forward.1} parent=1 // pred_region
      _
    $region45: #{uttt_evaluator_forward.1} parent=1 // pred_fallthru
      _
    // Predicated region
    $region46: #{uttt_evaluator_forward.1} parent=1 // pred_check
      _
    $region47: #{uttt_evaluator_forward.1} parent=1 // pred_check_branch
      %392 = sbr.rel (0) target = $region49
    $region48: #{uttt_evaluator_forward.1} parent=1 // pred_region
      _
    $region49: #{uttt_evaluator_forward.1} parent=1 // pred_fallthru
      _
    %393 = vsyncpa [#allocation4], 1
    %394 = vsyncpa [#allocation6], 1

</llo_original>
